<compile_context>
chip_gen: v6e
topology: v6e:2x2x1
jax: 0.10.0
libtpu: 0.0.40
codegen_flags: <defaults>
</compile_context>

<pallas_src>
import functools

import jax
import jax.numpy as jnp
from jax.experimental import pallas as pl
from jax.experimental.pallas import tpu as pltpu


def _round_up(x: int, m: int) -> int:
    return ((x + m - 1) // m) * m


def _sublane(dtype) -> int:
    return {4: 8, 2: 16, 1: 32}.get(jnp.dtype(dtype).itemsize, 8)


def prepare_adapter_params(params):
    """Pad / reshape adapter params once (hoisted out of the per-call path).

    Pads the bottleneck dim D to a multiple of 128 lanes (exact: silu(0) = 0 and the
    padded rows of W_up are zero, so padded columns contribute nothing) and reshapes
    biases / LN params to (1, X) row vectors.  Idempotent: already-prepared params are
    returned unchanged, so calling it again inside the forward is free of copies.
    """
    wd, bd = params["w_down"], params["b_down"]
    if bd.ndim == 2 and wd.shape[1] == bd.shape[1] and wd.shape[1] % 128 == 0:
        return params  # already prepared
    wu, bu = params["w_up"], params["b_up"]
    H, D = wd.shape
    Dp = max(_round_up(D, 128), 128)
    if Dp != D:
        wd = jnp.pad(wd, ((0, 0), (0, Dp - D)))
        bd = jnp.pad(bd, ((0, Dp - D),))
        wu = jnp.pad(wu, ((0, Dp - D), (0, 0)))
    prepared = {
        "w_down": wd, "b_down": bd.reshape(1, Dp),
        "w_up": wu, "b_up": bu.reshape(1, H),
    }
    if "ln_gamma" in params:
        prepared["ln_gamma"] = params["ln_gamma"].reshape(1, H)
        prepared["ln_beta"] = params["ln_beta"].reshape(1, H)
    return prepared


def _adapter_kernel(x_ref, res_ref, wd_ref, bd_ref, wu_ref, bu_ref, *rest,
                    use_layer_norm: bool, ln_eps: float, inv_h: float):
    if use_layer_norm:
        g_ref, b_ref, o_ref = rest
    else:
        (o_ref,) = rest

    # --- adapter_down: Linear(H -> D) + SiLU, SiLU applied a second time ---
    # Matmul inputs stay in native dtype (bf16 stays bf16 on the MXU); accumulate in f32.
    d = jnp.dot(x_ref[...], wd_ref[...], preferred_element_type=jnp.float32)
    d = d + bd_ref[...].astype(jnp.float32)
    d = d * jax.nn.sigmoid(d)          # silu #1 (inside adapter_down Sequential)
    d = d * jax.nn.sigmoid(d)          # silu #2 (explicit non_linearity call in forward)

    # --- adapter_up: Linear(D -> H), scaling = 1.0 ---
    u = jnp.dot(d.astype(wu_ref.dtype), wu_ref[...],
                preferred_element_type=jnp.float32)
    u = u + bu_ref[...].astype(jnp.float32)

    # adapter residual (== hidden_states from pre_forward) + post_forward residual_input.
    # x_ref is re-read here (cheap VMEM vld) instead of keeping the pre-matmul value
    # live across both matmuls.
    out = u + (x_ref[...].astype(jnp.float32) + res_ref[...].astype(jnp.float32))

    if use_layer_norm:
        # Two-pass (centered) variance: better conditioned than E[x^2]-E[x]^2 when the
        # row mean is large; the extra VPU pass is hidden under DMA.
        mean = jnp.sum(out, axis=-1, keepdims=True) * inv_h
        c = out - mean
        var = jnp.sum(c * c, axis=-1, keepdims=True) * inv_h
        out = c * jax.lax.rsqrt(var + ln_eps)
        out = out * g_ref[...].astype(jnp.float32) + b_ref[...].astype(jnp.float32)

    o_ref[...] = out.astype(o_ref.dtype)


def _vmem_footprint(tm, H, Dp, in_isize, w_isize, out_isize, use_layer_norm):
    # x, res, out streams are double-buffered by the pipeline.
    streams = 2 * tm * H * (2 * in_isize + out_isize)
    # Grid-invariant weights / biases are single-buffered (pl.Buffered(1)).
    wb = (H * Dp + Dp * H + Dp + H + (2 * H if use_layer_norm else 0)) * w_isize
    # f32 kernel-body temporaries (down tile + a few H-wide tiles for up/residual/LN).
    temps = (tm * Dp + 3 * tm * H) * 4
    return streams + wb + temps


def adapter_layer_forward(hidden_states, residual_input, params,
                          use_layer_norm=True, ln_eps=1e-5, tm=512):
    """Pallas implementation of AdapterLayer.forward.

    hidden_states, residual_input : (B, S, H)
    params : dict with w_down (H, D), b_down (D,), w_up (D, H), b_up (H,),
             ln_gamma (H,), ln_beta (H,)   (ln_* only used if use_layer_norm).
             Pass the result of prepare_adapter_params(params) to avoid per-call pads.
    """
    B, S, H = hidden_states.shape
    N = B * S
    in_dtype = hidden_states.dtype
    in_isize = jnp.dtype(in_dtype).itemsize
    sub = _sublane(in_dtype)

    params = prepare_adapter_params(params)   # no-op if already prepared
    wd, bd = params["w_down"], params["b_down"]
    wu, bu = params["w_up"], params["b_up"]
    Dp = wd.shape[1]
    w_isize = jnp.dtype(wd.dtype).itemsize

    # ---- VMEM-budget-derived row tile --------------------------------------
    try:
        info = pltpu.get_tpu_info()
        vmem_cap = int(getattr(info, "vmem_capacity_bytes", 64 << 20))
    except Exception:
        vmem_cap = 64 << 20            # conservative fallback (v7x per-TC VMEM)
    budget = (vmem_cap * 3) // 4       # target ~75% of per-core VMEM

    tm_eff = _round_up(min(tm, _round_up(N, sub)), sub)
    while (tm_eff > sub and
           _vmem_footprint(tm_eff, H, Dp, in_isize, w_isize, in_isize,
                           use_layer_norm) > budget):
        tm_eff = max(_round_up(tm_eff // 2, sub), sub)

    # At least 2 grid steps whenever N allows, so both v7x TensorCores stream.
    if N > sub and pl.cdiv(N, tm_eff) == 1:
        tm_eff = _round_up(pl.cdiv(N, 2), sub)

    n_steps = pl.cdiv(N, tm_eff)

    fp = _vmem_footprint(tm_eff, H, Dp, in_isize, w_isize, in_isize, use_layer_norm)
    vmem_limit = int(min(max(fp + fp // 4 + (4 << 20), 32 << 20),
                         (vmem_cap * 9) // 10))   # >= footprint, <= 90% of physical

    # ---- specs: no row padding, no output slice ----------------------------
    # Partial final block: loads beyond N are masked/undefined but compute is strictly
    # row-wise and the partial store is masked, so valid rows are unaffected.
    x2 = hidden_states.reshape(N, H)
    r2 = residual_input.reshape(N, H)

    invariant = pl.Buffered(1)   # grid-invariant operands: fetched once, single-buffered
    inputs = [x2, r2, wd, bd, wu, bu]
    in_specs = [
        pl.BlockSpec((tm_eff, H), lambda i: (i, 0)),                            # x rows
        pl.BlockSpec((tm_eff, H), lambda i: (i, 0)),                            # residual rows
        pl.BlockSpec((H, Dp), lambda i: (0, 0), pipeline_mode=invariant),       # W_down
        pl.BlockSpec((1, Dp), lambda i: (0, 0), pipeline_mode=invariant),       # b_down
        pl.BlockSpec((Dp, H), lambda i: (0, 0), pipeline_mode=invariant),       # W_up
        pl.BlockSpec((1, H), lambda i: (0, 0), pipeline_mode=invariant),        # b_up
    ]
    if use_layer_norm:
        inputs += [params["ln_gamma"], params["ln_beta"]]
        in_specs += [
            pl.BlockSpec((1, H), lambda i: (0, 0), pipeline_mode=invariant),
            pl.BlockSpec((1, H), lambda i: (0, 0), pipeline_mode=invariant),
        ]

    kernel = functools.partial(_adapter_kernel,
                               use_layer_norm=use_layer_norm,
                               ln_eps=float(ln_eps),
                               inv_h=1.0 / float(H))

    out = pl.pallas_call(
        kernel,
        out_shape=jax.ShapeDtypeStruct((N, H), in_dtype),
        grid_spec=pltpu.PrefetchScalarGridSpec(
            num_scalar_prefetch=0,
            grid=(n_steps,),
            in_specs=in_specs,
            out_specs=pl.BlockSpec((tm_eff, H), lambda i: (i, 0)),
        ),
        compiler_params=pltpu.CompilerParams(
            dimension_semantics=("parallel",),
            vmem_limit_bytes=vmem_limit),
    )(*inputs)

    return out.reshape(B, S, H)


def _reference(hidden_states, residual_input, params, use_layer_norm=True, ln_eps=1e-5):
    x = hidden_states.astype(jnp.float32)
    res = residual_input.astype(jnp.float32)
    d = x @ params["w_down"].astype(jnp.float32) + params["b_down"].astype(jnp.float32)
    d = jax.nn.silu(jax.nn.silu(d))
    u = d @ params["w_up"].astype(jnp.float32) + params["b_up"].astype(jnp.float32)
    out = u + x + res
    if use_layer_norm:
        mean = jnp.mean(out, axis=-1, keepdims=True)
        var = jnp.mean((out - mean) ** 2, axis=-1, keepdims=True)
        out = (out - mean) * jax.lax.rsqrt(var + ln_eps)
        out = out * params["ln_gamma"] + params["ln_beta"]
    return out.astype(hidden_states.dtype)


if __name__ == "__main__":
    # config: hidden_size=32, adapter_size (down_sample)=16; batch=2, seq=8
    B, S, H, D = 2, 8, 32, 16

    key = jax.random.PRNGKey(0)
    kx, kr, kwd, kwu = jax.random.split(key, 4)

    hidden_states = jax.random.normal(kx, (B, S, H), dtype=jnp.float32)
    residual_input = jax.random.normal(kr, (B, S, H), dtype=jnp.float32)

    # init_bert_weights: Linear weights ~ N(0, 0.02), biases zero; LayerNorm gamma=1, beta=0
    params = {
        "w_down": 0.02 * jax.random.normal(kwd, (H, D), dtype=jnp.float32),
        "b_down": jnp.zeros((D,), jnp.float32),
        "w_up": 0.02 * jax.random.normal(kwu, (D, H), dtype=jnp.float32),
        "b_up": jnp.zeros((H,), jnp.float32),
        "ln_gamma": jnp.ones((H,), jnp.float32),
        "ln_beta": jnp.zeros((H,), jnp.float32),
    }

    # hoist the (one-time) bottleneck-dim padding / bias reshape out of the call path
    prepared = prepare_adapter_params(params)

    # with transformer LayerNorm (post_forward: layer_norm(out + residual_input))
    out = adapter_layer_forward(hidden_states, residual_input, prepared, use_layer_norm=True)
    out = jax.block_until_ready(out)
    ref = _reference(hidden_states, residual_input, params, use_layer_norm=True)
    assert out.shape == (B, S, H)
    assert jnp.max(jnp.abs(out - ref)) < 1e-4

    # without LayerNorm (layer_norm=None in post_forward) — exercises the no-LN specs
    out2 = adapter_layer_forward(hidden_states, residual_input, prepared, use_layer_norm=False)
    out2 = jax.block_until_ready(out2)
    ref2 = _reference(hidden_states, residual_input, params, use_layer_norm=False)
    assert jnp.max(jnp.abs(out2 - ref2)) < 1e-4

    print("KERNEL_OK")
</pallas_src>

<mosaic_0001>
module attributes {stable_mosaic.version = 11 : i64} {
  func.func @_adapter_kernel(%arg0: i32, %arg1: memref<8x32xf32, #tpu.memory_space<vmem>>, %arg2: memref<8x32xf32, #tpu.memory_space<vmem>>, %arg3: memref<32x128xf32, #tpu.memory_space<vmem>>, %arg4: memref<1x128xf32, #tpu.memory_space<vmem>>, %arg5: memref<128x32xf32, #tpu.memory_space<vmem>>, %arg6: memref<1x32xf32, #tpu.memory_space<vmem>>, %arg7: memref<1x32xf32, #tpu.memory_space<vmem>>, %arg8: memref<1x32xf32, #tpu.memory_space<vmem>>, %arg9: memref<8x32xf32, #tpu.memory_space<vmem>>) attributes {dimension_semantics = [#tpu.dimension_semantics<parallel>], iteration_bounds = array<i64: 2>, scalar_prefetch = 0 : i64, scratch_operands = 0 : i64, tpu.core_type = #tpu.core_type<tc>, window_params = [{transform_indices = @transform_0, window_bounds = array<i64: 8, 32>}, {transform_indices = @transform_1, window_bounds = array<i64: 8, 32>}, {pipeline_mode = #tpu.pipeline_mode<synchronous>, transform_indices = @transform_2, window_bounds = array<i64: 32, 128>}, {pipeline_mode = #tpu.pipeline_mode<synchronous>, transform_indices = @transform_3, window_bounds = array<i64: 1, 128>}, {pipeline_mode = #tpu.pipeline_mode<synchronous>, transform_indices = @transform_4, window_bounds = array<i64: 128, 32>}, {pipeline_mode = #tpu.pipeline_mode<synchronous>, transform_indices = @transform_5, window_bounds = array<i64: 1, 32>}, {pipeline_mode = #tpu.pipeline_mode<synchronous>, transform_indices = @transform_6, window_bounds = array<i64: 1, 32>}, {pipeline_mode = #tpu.pipeline_mode<synchronous>, transform_indices = @transform_7, window_bounds = array<i64: 1, 32>}, {transform_indices = @transform_8, window_bounds = array<i64: 8, 32>}]} {
    %c0 = arith.constant 0 : index
    %c0_0 = arith.constant 0 : index
    %0 = vector.load %arg1[%c0, %c0_0] : memref<8x32xf32, #tpu.memory_space<vmem>>, vector<8x32xf32>
    %c0_1 = arith.constant 0 : index
    %c0_2 = arith.constant 0 : index
    %1 = vector.load %arg3[%c0_1, %c0_2] : memref<32x128xf32, #tpu.memory_space<vmem>>, vector<32x128xf32>
    %cst = arith.constant dense<0.000000e+00> : vector<8x128xf32>
    %2 = tpu.matmul %0, %1, %cst {dimension_numbers = #tpu.dot_dimension_numbers<[1], [0], [0], [1], [0, 0, 1, 1], [], []>} : vector<8x32xf32>, vector<32x128xf32>, vector<8x128xf32> -> vector<8x128xf32>
    %c0_3 = arith.constant 0 : index
    %c0_4 = arith.constant 0 : index
    %3 = vector.load %arg4[%c0_3, %c0_4] : memref<1x128xf32, #tpu.memory_space<vmem>>, vector<1x128xf32>
    %4 = vector.broadcast %3 : vector<1x128xf32> to vector<8x128xf32>
    %5 = arith.addf %2, %4 : vector<8x128xf32>
    %6 = arith.negf %5 : vector<8x128xf32>
    %7 = math.exp %6 : vector<8x128xf32>
    %cst_5 = arith.constant 1.000000e+00 : f32
    %8 = vector.broadcast %cst_5 : f32 to vector<8x128xf32>
    %9 = arith.addf %8, %7 : vector<8x128xf32>
    %10 = arith.divf %8, %9 : vector<8x128xf32>
    %11 = arith.mulf %5, %10 : vector<8x128xf32>
    %12 = arith.negf %11 : vector<8x128xf32>
    %13 = math.exp %12 : vector<8x128xf32>
    %cst_6 = arith.constant 1.000000e+00 : f32
    %14 = vector.broadcast %cst_6 : f32 to vector<8x128xf32>
    %15 = arith.addf %14, %13 : vector<8x128xf32>
    %16 = arith.divf %14, %15 : vector<8x128xf32>
    %17 = arith.mulf %11, %16 : vector<8x128xf32>
    %c0_7 = arith.constant 0 : index
    %c0_8 = arith.constant 0 : index
    %18 = vector.load %arg5[%c0_7, %c0_8] : memref<128x32xf32, #tpu.memory_space<vmem>>, vector<128x32xf32>
    %cst_9 = arith.constant dense<0.000000e+00> : vector<8x32xf32>
    %19 = tpu.matmul %17, %18, %cst_9 {dimension_numbers = #tpu.dot_dimension_numbers<[1], [0], [0], [1], [0, 0, 1, 1], [], []>} : vector<8x128xf32>, vector<128x32xf32>, vector<8x32xf32> -> vector<8x32xf32>
    %c0_10 = arith.constant 0 : index
    %c0_11 = arith.constant 0 : index
    %20 = vector.load %arg6[%c0_10, %c0_11] : memref<1x32xf32, #tpu.memory_space<vmem>>, vector<1x32xf32>
    %21 = vector.broadcast %20 : vector<1x32xf32> to vector<8x32xf32>
    %22 = arith.addf %19, %21 : vector<8x32xf32>
    %c0_12 = arith.constant 0 : index
    %c0_13 = arith.constant 0 : index
    %23 = vector.load %arg1[%c0_12, %c0_13] : memref<8x32xf32, #tpu.memory_space<vmem>>, vector<8x32xf32>
    %c0_14 = arith.constant 0 : index
    %c0_15 = arith.constant 0 : index
    %24 = vector.load %arg2[%c0_14, %c0_15] : memref<8x32xf32, #tpu.memory_space<vmem>>, vector<8x32xf32>
    %25 = arith.addf %23, %24 : vector<8x32xf32>
    %26 = arith.addf %22, %25 : vector<8x32xf32>
    %cst_16 = arith.constant dense<0.000000e+00> : vector<8xf32>
    %27 = vector.multi_reduction <add>, %26, %cst_16 [1] : vector<8x32xf32> to vector<8xf32>
    %28 = vector.shape_cast %27 : vector<8xf32> to vector<8x1xf32>
    %cst_17 = arith.constant 3.125000e-02 : f32
    %29 = vector.broadcast %cst_17 : f32 to vector<8x1xf32>
    %30 = arith.mulf %28, %29 : vector<8x1xf32>
    %31 = vector.broadcast %30 : vector<8x1xf32> to vector<8x32xf32>
    %32 = arith.subf %26, %31 : vector<8x32xf32>
    %33 = arith.mulf %32, %32 : vector<8x32xf32>
    %cst_18 = arith.constant dense<0.000000e+00> : vector<8xf32>
    %34 = vector.multi_reduction <add>, %33, %cst_18 [1] : vector<8x32xf32> to vector<8xf32>
    %35 = vector.shape_cast %34 : vector<8xf32> to vector<8x1xf32>
    %cst_19 = arith.constant 3.125000e-02 : f32
    %36 = vector.broadcast %cst_19 : f32 to vector<8x1xf32>
    %37 = arith.mulf %35, %36 : vector<8x1xf32>
    %cst_20 = arith.constant 9.99999974E-6 : f32
    %38 = vector.broadcast %cst_20 : f32 to vector<8x1xf32>
    %39 = arith.addf %37, %38 : vector<8x1xf32>
    %40 = math.rsqrt %39 : vector<8x1xf32>
    %41 = vector.broadcast %40 : vector<8x1xf32> to vector<8x32xf32>
    %42 = arith.mulf %32, %41 : vector<8x32xf32>
    %c0_21 = arith.constant 0 : index
    %c0_22 = arith.constant 0 : index
    %43 = vector.load %arg7[%c0_21, %c0_22] : memref<1x32xf32, #tpu.memory_space<vmem>>, vector<1x32xf32>
    %44 = vector.broadcast %43 : vector<1x32xf32> to vector<8x32xf32>
    %45 = arith.mulf %42, %44 : vector<8x32xf32>
    %c0_23 = arith.constant 0 : index
    %c0_24 = arith.constant 0 : index
    %46 = vector.load %arg8[%c0_23, %c0_24] : memref<1x32xf32, #tpu.memory_space<vmem>>, vector<1x32xf32>
    %47 = vector.broadcast %46 : vector<1x32xf32> to vector<8x32xf32>
    %48 = arith.addf %45, %47 : vector<8x32xf32>
    %c0_25 = arith.constant 0 : index
    %c0_26 = arith.constant 0 : index
    %49 = vector.load %arg9[%c0_25, %c0_26] : memref<8x32xf32, #tpu.memory_space<vmem>>, vector<8x32xf32>
    tpu.vector_store %arg9[%c0_25, %c0_26], %48 {strides = array<i32>} : memref<8x32xf32, #tpu.memory_space<vmem>>, vector<8x32xf32>,
    return
  }
  func.func @transform_0(%arg0: i32) -> (i32, i32) {
    %c0_i32 = arith.constant 0 : i32
    %c0_i32_0 = arith.constant 0 : i32
    return %arg0, %c0_i32 : i32, i32
  }
  func.func @transform_1(%arg0: i32) -> (i32, i32) {
    %c0_i32 = arith.constant 0 : i32
    %c0_i32_0 = arith.constant 0 : i32
    return %arg0, %c0_i32 : i32, i32
  }
  func.func @transform_2(%arg0: i32) -> (i32, i32) {
    %c0_i32 = arith.constant 0 : i32
    %c0_i32_0 = arith.constant 0 : i32
    %c0_i32_1 = arith.constant 0 : i32
    return %c0_i32, %c0_i32_0 : i32, i32
  }
  func.func @transform_3(%arg0: i32) -> (i32, i32) {
    %c0_i32 = arith.constant 0 : i32
    %c0_i32_0 = arith.constant 0 : i32
    %c0_i32_1 = arith.constant 0 : i32
    return %c0_i32, %c0_i32_0 : i32, i32
  }
  func.func @transform_4(%arg0: i32) -> (i32, i32) {
    %c0_i32 = arith.constant 0 : i32
    %c0_i32_0 = arith.constant 0 : i32
    %c0_i32_1 = arith.constant 0 : i32
    return %c0_i32, %c0_i32_0 : i32, i32
  }
  func.func @transform_5(%arg0: i32) -> (i32, i32) {
    %c0_i32 = arith.constant 0 : i32
    %c0_i32_0 = arith.constant 0 : i32
    %c0_i32_1 = arith.constant 0 : i32
    return %c0_i32, %c0_i32_0 : i32, i32
  }
  func.func @transform_6(%arg0: i32) -> (i32, i32) {
    %c0_i32 = arith.constant 0 : i32
    %c0_i32_0 = arith.constant 0 : i32
    %c0_i32_1 = arith.constant 0 : i32
    return %c0_i32, %c0_i32_0 : i32, i32
  }
  func.func @transform_7(%arg0: i32) -> (i32, i32) {
    %c0_i32 = arith.constant 0 : i32
    %c0_i32_0 = arith.constant 0 : i32
    %c0_i32_1 = arith.constant 0 : i32
    return %c0_i32, %c0_i32_0 : i32, i32
  }
  func.func @transform_8(%arg0: i32) -> (i32, i32) {
    %c0_i32 = arith.constant 0 : i32
    %c0_i32_0 = arith.constant 0 : i32
    return %arg0, %c0_i32 : i32, i32
  }
}

</mosaic_0001>

<llo_original>
// kernel: tpu_custom_call.1
$region0: #{tpu_custom_call.1}
  #allocation0 [shape = 'u32[]', space=smem, size = 0x4, offset = 0x4, fixed_abs, tag = 'smem constant byte address 0x4 - core index']
  #allocation1 [shape = 'u32[144,128]{1,0:T(1,128)}', space=vmem, size = 0x12000, scoped, tag = 'internal scratch']
  %s0 = inlined_call_operand.vmem [shape: f32[16,32], index: 0, kind: input, shape index: {}]
  %s1 = inlined_call_operand.vmem [shape: f32[16,32], index: 1, kind: input, shape index: {}]
  %s2 = inlined_call_operand.vmem [shape: f32[32,128], index: 2, kind: input, shape index: {}]
  %s3 = inlined_call_operand.vmem [shape: f32[1,128], index: 3, kind: input, shape index: {}]
  %s4 = inlined_call_operand.vmem [shape: f32[128,32], index: 4, kind: input, shape index: {}]
  %s5 = inlined_call_operand.vmem [shape: f32[1,32], index: 5, kind: input, shape index: {}]
  %s6 = inlined_call_operand.vmem [shape: f32[1,32], index: 6, kind: input, shape index: {}]
  %s7 = inlined_call_operand.vmem [shape: f32[1,32], index: 7, kind: input, shape index: {}]
  %s8 = inlined_call_operand.hbm [shape: f32[16,32], index: 8, kind: output, shape index: {}]
  %s9 = sld [smem:[#allocation0]]
  $region65: #{tpu_custom_call.1} parent=0
    _
  %s11 = ssub.s32 1, %s9
  %s12 = scalar_select 0, %s11, %s9
  $region1: #{tpu_custom_call.1} parent=0
    #allocation2 [shape = 'u8[8192]{0}', space=vmem, size = 0x2000, scoped, tag = 'output window, operand 0']
    #allocation3 [shape = 's32[2]{0}', space=sflag, size = 0x8, scoped, tag = 'scoped memory for tpu_custom_call.1']
    %13 = vsyncpa [#allocation3], 0
    %s14 = scalar_lea.sflag [#allocation3], 1
    %15 = vsyncpa %s14, 0
    loop: start=0, step=1, limit=4
    $region2: #{tpu_custom_call.1} parent=1 // loop_pre_header
      _
    $region3: #{tpu_custom_call.1} parent=1 // loop_header
      %s17 = sphi 0, %s21
      %p18 = scmp.ge.s32.totalorder %s17, 4
      %s27 = sphi 0, %s29
      %s30 = sphi 0, %s27
      %s31 = sphi 0, %s30
      %s47 = sphi 0, %s31
      %s53 = sphi 0, %s55
      %s56 = sphi 0, %s53
      %s57 = sphi 0, %s56
      %s73 = sphi 0, %s57
      %s77 = sphi 0, %s77
      %s79 = sphi 0, %s77
      %s80 = sphi 0, %s79
      %s94 = sphi 0, %s80
      %s98 = sphi 0, %s98
      %s100 = sphi 0, %s98
      %s101 = sphi 0, %s100
      %s115 = sphi 0, %s101
      %s119 = sphi 0, %s119
      %s121 = sphi 0, %s119
      %s122 = sphi 0, %s121
      %s136 = sphi 0, %s122
      %s140 = sphi 0, %s140
      %s142 = sphi 0, %s140
      %s143 = sphi 0, %s142
      %s157 = sphi 0, %s143
      %s161 = sphi 0, %s161
      %s163 = sphi 0, %s161
      %s164 = sphi 0, %s163
      %s178 = sphi 0, %s164
      %s182 = sphi 0, %s182
      %s184 = sphi 0, %s182
      %s185 = sphi 0, %s184
      %s199 = sphi 0, %s185
      %s205 = sphi 0, %s207
      %s208 = sphi 0, %s205
      %s209 = sphi 0, %s208
      %s225 = sphi 0, %s209
    $region4: #{tpu_custom_call.1} parent=1 // loop_header_branch
      %20 = sbr.rel (%p18) target = $region8
    $region5: #{tpu_custom_call.1} parent=1 // loop_body
      %s22 = ssub.s32 %s17, 1
      %s23 = ssub.s32 %s17, 2
      %s24 = sadd.s32 %s17, 1
      %s25 = ssub.s32 %s17, %s24
      %p26 = scmp.eq.s32.totalorder %s25, 0
      %s28 = sadd.s32 %s27, 1
      %s29 = scalar_select %p26, %s27, %s28
      %p32 = pneg %p26
      %p33 = scmp.eq.s32.totalorder %s17, 1
      %p34 = por %p32, %p33
      %p35 = scmp.ne.s32.totalorder %s27, %s30
      %p36 = scmp.eq.s32.totalorder %s17, 0
      %p37 = por %p35, %p36
      %p38 = scmp.ne.s32.totalorder %s27, %s30
      %p39 = scmp.eq.s32.totalorder %s22, 1
      %p40 = por %p38, %p39
      %p41 = scmp.ne.s32.totalorder %s30, %s31
      %p42 = scmp.eq.s32.totalorder %s22, 0
      %p43 = por %p41, %p42
      %p44 = scmp.ne.s32.totalorder %s30, %s31
      %p45 = scmp.eq.s32.totalorder %s23, 1
      %p46 = por %p44, %p45
      %p48 = scmp.ne.s32.totalorder %s31, %s47
      %p49 = scmp.eq.s32.totalorder %s23, 0
      %p50 = por %p48, %p49
      %s51 = ssub.s32 %s17, %s24
      %p52 = scmp.eq.s32.totalorder %s51, 0
      %s54 = sadd.s32 %s53, 1
      %s55 = scalar_select %p52, %s53, %s54
      %p58 = pneg %p52
      %p59 = scmp.eq.s32.totalorder %s17, 1
      %p60 = por %p58, %p59
      %p61 = scmp.ne.s32.totalorder %s53, %s56
      %p62 = scmp.eq.s32.totalorder %s17, 0
      %p63 = por %p61, %p62
      %p64 = scmp.ne.s32.totalorder %s53, %s56
      %p65 = scmp.eq.s32.totalorder %s22, 1
      %p66 = por %p64, %p65
      %p67 = scmp.ne.s32.totalorder %s56, %s57
      %p68 = scmp.eq.s32.totalorder %s22, 0
      %p69 = por %p67, %p68
      %p70 = scmp.ne.s32.totalorder %s56, %s57
      %p71 = scmp.eq.s32.totalorder %s23, 1
      %p72 = por %p70, %p71
      %p74 = scmp.ne.s32.totalorder %s57, %s73
      %p75 = scmp.eq.s32.totalorder %s23, 0
      %p76 = por %p74, %p75
      %s78 = sadd.s32 %s77, 1
      %p81 = scmp.eq.s32.totalorder %s17, 1
      %p82 = scmp.ne.s32.totalorder %s77, %s79
      %p83 = scmp.eq.s32.totalorder %s17, 0
      %p84 = por %p82, %p83
      %p85 = scmp.ne.s32.totalorder %s77, %s79
      %p86 = scmp.eq.s32.totalorder %s22, 1
      %p87 = por %p85, %p86
      %p88 = scmp.ne.s32.totalorder %s79, %s80
      %p89 = scmp.eq.s32.totalorder %s22, 0
      %p90 = por %p88, %p89
      %p91 = scmp.ne.s32.totalorder %s79, %s80
      %p92 = scmp.eq.s32.totalorder %s23, 1
      %p93 = por %p91, %p92
      %p95 = scmp.ne.s32.totalorder %s80, %s94
      %p96 = scmp.eq.s32.totalorder %s23, 0
      %p97 = por %p95, %p96
      %s99 = sadd.s32 %s98, 1
      %p102 = scmp.eq.s32.totalorder %s17, 1
      %p103 = scmp.ne.s32.totalorder %s98, %s100
      %p104 = scmp.eq.s32.totalorder %s17, 0
      %p105 = por %p103, %p104
      %p106 = scmp.ne.s32.totalorder %s98, %s100
      %p107 = scmp.eq.s32.totalorder %s22, 1
      %p108 = por %p106, %p107
      %p109 = scmp.ne.s32.totalorder %s100, %s101
      %p110 = scmp.eq.s32.totalorder %s22, 0
      %p111 = por %p109, %p110
      %p112 = scmp.ne.s32.totalorder %s100, %s101
      %p113 = scmp.eq.s32.totalorder %s23, 1
      %p114 = por %p112, %p113
      %p116 = scmp.ne.s32.totalorder %s101, %s115
      %p117 = scmp.eq.s32.totalorder %s23, 0
      %p118 = por %p116, %p117
      %s120 = sadd.s32 %s119, 1
      %p123 = scmp.eq.s32.totalorder %s17, 1
      %p124 = scmp.ne.s32.totalorder %s119, %s121
      %p125 = scmp.eq.s32.totalorder %s17, 0
      %p126 = por %p124, %p125
      %p127 = scmp.ne.s32.totalorder %s119, %s121
      %p128 = scmp.eq.s32.totalorder %s22, 1
      %p129 = por %p127, %p128
      %p130 = scmp.ne.s32.totalorder %s121, %s122
      %p131 = scmp.eq.s32.totalorder %s22, 0
      %p132 = por %p130, %p131
      %p133 = scmp.ne.s32.totalorder %s121, %s122
      %p134 = scmp.eq.s32.totalorder %s23, 1
      %p135 = por %p133, %p134
      %p137 = scmp.ne.s32.totalorder %s122, %s136
      %p138 = scmp.eq.s32.totalorder %s23, 0
      %p139 = por %p137, %p138
      %s141 = sadd.s32 %s140, 1
      %p144 = scmp.eq.s32.totalorder %s17, 1
      %p145 = scmp.ne.s32.totalorder %s140, %s142
      %p146 = scmp.eq.s32.totalorder %s17, 0
      %p147 = por %p145, %p146
      %p148 = scmp.ne.s32.totalorder %s140, %s142
      %p149 = scmp.eq.s32.totalorder %s22, 1
      %p150 = por %p148, %p149
      %p151 = scmp.ne.s32.totalorder %s142, %s143
      %p152 = scmp.eq.s32.totalorder %s22, 0
      %p153 = por %p151, %p152
      %p154 = scmp.ne.s32.totalorder %s142, %s143
      %p155 = scmp.eq.s32.totalorder %s23, 1
      %p156 = por %p154, %p155
      %p158 = scmp.ne.s32.totalorder %s143, %s157
      %p159 = scmp.eq.s32.totalorder %s23, 0
      %p160 = por %p158, %p159
      %s162 = sadd.s32 %s161, 1
      %p165 = scmp.eq.s32.totalorder %s17, 1
      %p166 = scmp.ne.s32.totalorder %s161, %s163
      %p167 = scmp.eq.s32.totalorder %s17, 0
      %p168 = por %p166, %p167
      %p169 = scmp.ne.s32.totalorder %s161, %s163
      %p170 = scmp.eq.s32.totalorder %s22, 1
      %p171 = por %p169, %p170
      %p172 = scmp.ne.s32.totalorder %s163, %s164
      %p173 = scmp.eq.s32.totalorder %s22, 0
      %p174 = por %p172, %p173
      %p175 = scmp.ne.s32.totalorder %s163, %s164
      %p176 = scmp.eq.s32.totalorder %s23, 1
      %p177 = por %p175, %p176
      %p179 = scmp.ne.s32.totalorder %s164, %s178
      %p180 = scmp.eq.s32.totalorder %s23, 0
      %p181 = por %p179, %p180
      %s183 = sadd.s32 %s182, 1
      %p186 = scmp.eq.s32.totalorder %s17, 1
      %p187 = scmp.ne.s32.totalorder %s182, %s184
      %p188 = scmp.eq.s32.totalorder %s17, 0
      %p189 = por %p187, %p188
      %p190 = scmp.ne.s32.totalorder %s182, %s184
      %p191 = scmp.eq.s32.totalorder %s22, 1
      %p192 = por %p190, %p191
      %p193 = scmp.ne.s32.totalorder %s184, %s185
      %p194 = scmp.eq.s32.totalorder %s22, 0
      %p195 = por %p193, %p194
      %p196 = scmp.ne.s32.totalorder %s184, %s185
      %p197 = scmp.eq.s32.totalorder %s23, 1
      %p198 = por %p196, %p197
      %p200 = scmp.ne.s32.totalorder %s185, %s199
      %p201 = scmp.eq.s32.totalorder %s23, 0
      %p202 = por %p200, %p201
      %s203 = ssub.s32 %s17, %s24
      %p204 = scmp.eq.s32.totalorder %s203, 0
      %s206 = sadd.s32 %s205, 1
      %s207 = scalar_select %p204, %s205, %s206
      %p210 = pneg %p204
      %p211 = scmp.eq.s32.totalorder %s17, 1
      %p212 = por %p210, %p211
      %p213 = scmp.ne.s32.totalorder %s205, %s208
      %p214 = scmp.eq.s32.totalorder %s17, 0
      %p215 = por %p213, %p214
      %p216 = scmp.ne.s32.totalorder %s205, %s208
      %p217 = scmp.eq.s32.totalorder %s22, 1
      %p218 = por %p216, %p217
      %p219 = scmp.ne.s32.totalorder %s208, %s209
      %p220 = scmp.eq.s32.totalorder %s22, 0
      %p221 = por %p219, %p220
      %p222 = scmp.ne.s32.totalorder %s208, %s209
      %p223 = scmp.eq.s32.totalorder %s23, 1
      %p224 = por %p222, %p223
      %p226 = scmp.ne.s32.totalorder %s209, %s225
      %p227 = scmp.eq.s32.totalorder %s23, 0
      %p228 = por %p226, %p227
      %p229 = scmp.le.s32.totalorder 1, %s17
      %p230 = scmp.lt.s32.totalorder %s17, 3
      %p231 = pnand %p229, %p230
      %p232 = pneg %p231
      // Predicated region
      $region9: #{tpu_custom_call.1} parent=5 // pred_check
        _
      $region10: #{tpu_custom_call.1} parent=5 // pred_check_branch
        %234 = sbr.rel (%p231) target = $region12
      $region11: #{tpu_custom_call.1} parent=5 // pred_region
        %s235 = ssub.s32 %s17, 1
        // Predicated region
        $region13: #{tpu_custom_call.1} parent=11 // pred_check
          %p236 = pneg %p90
        $region14: #{tpu_custom_call.1} parent=11 // pred_check_branch
          %238 = sbr.rel (%p236) target = $region16
        $region15: #{tpu_custom_call.1} parent=11 // pred_region
          _
        $region16: #{tpu_custom_call.1} parent=11 // pred_fallthru
          _
        // Predicated region
        $region17: #{tpu_custom_call.1} parent=11 // pred_check
          %p239 = pneg %p111
        $region18: #{tpu_custom_call.1} parent=11 // pred_check_branch
          %241 = sbr.rel (%p239) target = $region20
        $region19: #{tpu_custom_call.1} parent=11 // pred_region
          _
        $region20: #{tpu_custom_call.1} parent=11 // pred_fallthru
          _
        // Predicated region
        $region21: #{tpu_custom_call.1} parent=11 // pred_check
          %p242 = pneg %p132
        $region22: #{tpu_custom_call.1} parent=11 // pred_check_branch
          %244 = sbr.rel (%p242) target = $region24
        $region23: #{tpu_custom_call.1} parent=11 // pred_region
          _
        $region24: #{tpu_custom_call.1} parent=11 // pred_fallthru
          _
        // Predicated region
        $region25: #{tpu_custom_call.1} parent=11 // pred_check
          %p245 = pneg %p153
        $region26: #{tpu_custom_call.1} parent=11 // pred_check_branch
          %247 = sbr.rel (%p245) target = $region28
        $region27: #{tpu_custom_call.1} parent=11 // pred_region
          _
        $region28: #{tpu_custom_call.1} parent=11 // pred_fallthru
          _
        // Predicated region
        $region29: #{tpu_custom_call.1} parent=11 // pred_check
          %p248 = pneg %p174
        $region30: #{tpu_custom_call.1} parent=11 // pred_check_branch
          %250 = sbr.rel (%p248) target = $region32
        $region31: #{tpu_custom_call.1} parent=11 // pred_region
          _
        $region32: #{tpu_custom_call.1} parent=11 // pred_fallthru
          _
        // Predicated region
        $region33: #{tpu_custom_call.1} parent=11 // pred_check
          %p251 = pneg %p195
        $region34: #{tpu_custom_call.1} parent=11 // pred_check_branch
          %253 = sbr.rel (%p251) target = $region36
        $region35: #{tpu_custom_call.1} parent=11 // pred_region
          _
        $region36: #{tpu_custom_call.1} parent=11 // pred_fallthru
          _
      $region12: #{tpu_custom_call.1} parent=5 // pred_fallthru
        _
      %p254 = scmp.lt.s32.totalorder %s17, 2
      // Predicated region
      $region37: #{tpu_custom_call.1} parent=5 // pred_check
        %p255 = pneg %p254
      $region38: #{tpu_custom_call.1} parent=5 // pred_check_branch
        %257 = sbr.rel (%p255) target = $region40
      $region39: #{tpu_custom_call.1} parent=5 // pred_region
        // Predicated region
        $region41: #{tpu_custom_call.1} parent=39 // pred_check
          %p258 = pneg %p37
        $region42: #{tpu_custom_call.1} parent=39 // pred_check_branch
          %260 = sbr.rel (%p258) target = $region44
        $region43: #{tpu_custom_call.1} parent=39 // pred_region
          %p261 = scmp.lt.s32.totalorder %s17, 1
          %s262 = scalar_select %p261, %s17, 1
          %s263 = smul.addr %s262, 8
          %s264 = scalar_lea.vmem %s0, %s263
        $region44: #{tpu_custom_call.1} parent=39 // pred_fallthru
          _
        // Predicated region
        $region45: #{tpu_custom_call.1} parent=39 // pred_check
          %p265 = pneg %p63
        $region46: #{tpu_custom_call.1} parent=39 // pred_check_branch
          %267 = sbr.rel (%p265) target = $region48
        $region47: #{tpu_custom_call.1} parent=39 // pred_region
          %p268 = scmp.lt.s32.totalorder %s17, 1
          %s269 = scalar_select %p268, %s17, 1
          %s270 = smul.addr %s269, 8
          %s271 = scalar_lea.vmem %s1, %s270
        $region48: #{tpu_custom_call.1} parent=39 // pred_fallthru
          _
      $region40: #{tpu_custom_call.1} parent=5 // pred_fallthru
        _
      %p272 = scmp.le.s32.totalorder 1, %s17
      %p273 = scmp.lt.s32.totalorder %s17, 3
      %p274 = pnand %p272, %p273
      %p275 = pneg %p274
      // Predicated region
      $region49: #{tpu_custom_call.1} parent=5 // pred_check
        _
      $region50: #{tpu_custom_call.1} parent=5 // pred_check_branch
        %277 = sbr.rel (%p274) target = $region52
      $region51: #{tpu_custom_call.1} parent=5 // pred_region
        %s278 = ssub.s32 %s17, 1
        %p279 = scmp.lt.s32.totalorder %s22, 1
        %s280 = scalar_select %p279, %s22, 1
        %s281 = smul.addr %s280, 8
        %s282 = scalar_lea.vmem %s0, %s281
        %p283 = pneg %p43
        %p284 = pneg %p40
        %p285 = scmp.lt.s32.totalorder %s22, 1
        %s286 = scalar_select %p285, %s22, 1
        %s287 = smul.addr %s286, 8
        %s288 = scalar_lea.vmem %s1, %s287
        %p289 = pneg %p69
        %p290 = pneg %p66
        %p291 = pneg %p90
        %p292 = pneg %p87
        %p293 = pneg %p111
        %p294 = pneg %p108
        %p295 = pneg %p132
        %p296 = pneg %p129
        %p297 = pneg %p153
        %p298 = pneg %p150
        %p299 = pneg %p174
        %p300 = pneg %p171
        %p301 = pneg %p195
        %p302 = pneg %p192
        %p303 = pneg %p221
        %p304 = pneg %p218
        %s305 = sand.u32 %s208, 1
        %s306 = scalar_lea.sflag [#allocation3], %s305
        %s307 = sand.u32 %s208, 1
        %s308 = smul.addr %s307, 8
        %s309 = scalar_lea.vmem [#allocation2], %s308
        %p310 = scmp.lt.s32.totalorder %s22, 1
        %s311 = scalar_select %p310, %s22, 1
        %s312 = smul.addr %s311, 8
        %s313 = scalar_lea.vmem %s0, %s312
        %p314 = scmp.lt.s32.totalorder %s22, 1
        %s315 = scalar_select %p314, %s22, 1
        %s316 = smul.addr %s315, 8
        %s317 = scalar_lea.vmem %s1, %s316
        %v318 = vld [vmem:[%s313] sm:$0xff]
        %v319 = vld [vmem:[%s2] sm:$0xff]
        %v320 = vld [vmem:[%s2 + $0x8] sm:$0xff]
        %v321 = vld [vmem:[%s2 + $0x10] sm:$0xff]
        %v322 = vld [vmem:[%s2 + $0x18] sm:$0xff]
        %v323 = vld [vmem:[%s3] sm:$0x1]
        %v325 = vlaneseq
        %v326 = vshrl.u32 %v325, 7
        %v327 = vsub.s32 0, %v326
        %v328 = vrot.slane %v323, %v327
        %vm330 = vcmask 261120
        %v332 = vsel %vm330, %v318, 0
        %334 = vmatprep.subr.mxu0 0.0
        %335 = vmatpush1.msra.mxu0 0.0
        %336 = vmatprep.subr.mxu0 0.0
        %337 = vmatpush1.msra.mxu0 0.0
        %338 = vmatprep.subr.mxu0 0.0
        %339 = vmatpush1.msra.mxu0 0.0
        %340 = vmatprep.subr.mxu0 0.0
        %341 = vmatpush1.msra.mxu0 0.0
        %342 = vmatprep.subr.mxu0 0.0
        %343 = vmatpush1.msra.mxu0 0.0
        %344 = vmatprep.subr.mxu0 0.0
        %345 = vmatpush1.msra.mxu0 0.0
        %346 = vmatprep.subr.mxu0 0.0
        %347 = vmatpush1.msra.mxu0 0.0
        %348 = vmatprep.subr.mxu0 0.0
        %349 = vmatpush1.msra.mxu0 0.0
        %350 = vmatprep.subr.mxu0 0.0
        %351 = vmatpush1.msra.mxu0 0.0
        %352 = vmatprep.subr.mxu0 0.0
        %353 = vmatpush1.msra.mxu0 0.0
        %354 = vmatprep.subr.mxu0 0.0
        %355 = vmatpush1.msra.mxu0 0.0
        %356 = vmatprep.subr.mxu0 0.0
        %357 = vmatpush1.msra.mxu0 0.0
        %358 = vmatprep.subr.mxu0 0.0
        %359 = vmatpush1.msra.mxu0 %v322
        %360 = vmatprep.subr.mxu0 0.0
        %361 = vmatpush1.msra.mxu0 %v321
        %362 = vmatprep.subr.mxu0 0.0
        %363 = vmatpush1.msra.mxu0 %v320
        %364 = vmatprep.subr.mxu0 0.0
        %365 = vmatpush1.msra.mxu0 %v319
        %366 = vmatprep.subr.mxu0 0.0
        %367 = vmatpush2.msra.mxu0 0.0
        %368 = vmatprep.subr.mxu0 0.0
        %369 = vmatpush2.msra.mxu0 0.0
        %370 = vmatprep.subr.mxu0 0.0
        %371 = vmatpush2.msra.mxu0 0.0
        %372 = vmatprep.subr.mxu0 0.0
        %373 = vmatpush2.msra.mxu0 0.0
        %374 = vmatprep.subr.mxu0 0.0
        %375 = vmatpush2.msra.mxu0 0.0
        %376 = vmatprep.subr.mxu0 0.0
        %377 = vmatpush2.msra.mxu0 0.0
        %378 = vmatprep.subr.mxu0 0.0
        %379 = vmatpush2.msra.mxu0 0.0
        %380 = vmatprep.subr.mxu0 0.0
        %381 = vmatpush2.msra.mxu0 0.0
        %382 = vmatprep.subr.mxu0 0.0
        %383 = vmatpush2.msra.mxu0 0.0
        %384 = vmatprep.subr.mxu0 0.0
        %385 = vmatpush2.msra.mxu0 0.0
        %386 = vmatprep.subr.mxu0 0.0
        %387 = vmatpush2.msra.mxu0 0.0
        %388 = vmatprep.subr.mxu0 0.0
        %389 = vmatpush2.msra.mxu0 0.0
        %390 = vmatprep.subr.mxu0 0.0
        %391 = vmatpush2.msra.mxu0 0.0
        %392 = vmatprep.subr.mxu0 0.0
        %393 = vmatpush2.msra.mxu0 0.0
        %394 = vmatprep.subr.mxu0 0.0
        %395 = vmatpush2.msra.mxu0 0.0
        %396 = vmatprep.subr.mxu0 0.0
        %397 = vmatpush2.msra.mxu0 0.0
        %398 = vmatprep.mubr.f32.mxu0 0.0
        %399 = vmatmul.mubr.f32.gmra.mxu0 %v332
        %v400 = vpop.f32.mrf.mxu0
        %v401 = vadd.f32 %v328, %v400
        %v402 = vpop.f32.mrf.mxu0
        %403 = vdwg.mxu0
        %v404 = vxor.u32 %v401, 2147483648
        %v405 = vmul.f32 %v404, 1.442695
        %v406 = vpow.pop %v405
        %v407 = vadd.f32 %v406, 1.0
        %v408 = vrcp.pop %v407
        %v409 = vmul.f32 1.0, %v408
        %v410 = vmul.f32 %v401, %v409
        %v411 = vxor.u32 %v410, 2147483648
        %v412 = vmul.f32 %v411, 1.442695
        %v413 = vpow.pop %v412
        %v414 = vadd.f32 %v413, 1.0
        %v415 = vrcp.pop %v414
        %v416 = vmul.f32 1.0, %v415
        %v417 = vmul.f32 %v410, %v416
        %v418 = vld [vmem:[%s4] sm:$0xff]
        %v419 = vld [vmem:[%s4 + $0x8] sm:$0xff]
        %v420 = vld [vmem:[%s4 + $0x10] sm:$0xff]
        %v421 = vld [vmem:[%s4 + $0x18] sm:$0xff]
        %v422 = vld [vmem:[%s4 + $0x20] sm:$0xff]
        %v423 = vld [vmem:[%s4 + $0x28] sm:$0xff]
        %v424 = vld [vmem:[%s4 + $0x30] sm:$0xff]
        %v425 = vld [vmem:[%s4 + $0x38] sm:$0xff]
        %v426 = vld [vmem:[%s4 + $0x40] sm:$0xff]
        %v427 = vld [vmem:[%s4 + $0x48] sm:$0xff]
        %v428 = vld [vmem:[%s4 + $0x50] sm:$0xff]
        %v429 = vld [vmem:[%s4 + $0x58] sm:$0xff]
        %v430 = vld [vmem:[%s4 + $0x60] sm:$0xff]
        %v431 = vld [vmem:[%s4 + $0x68] sm:$0xff]
        %v432 = vld [vmem:[%s4 + $0x70] sm:$0xff]
        %v433 = vld [vmem:[%s4 + $0x78] sm:$0xff]
        %v434 = vld [vmem:[%s5] sm:$0x1]
        %v436 = vlaneseq
        %v437 = vshrl.u32 %v436, 7
        %v438 = vsub.s32 0, %v437
        %v439 = vrot.slane %v434, %v438
        %441 = vmatprep.subr.mxu0 0.0
        %442 = vmatpush1.msra.mxu0 %v433
        %443 = vmatprep.subr.mxu0 0.0
        %444 = vmatpush1.msra.mxu0 %v432
        %445 = vmatprep.subr.mxu0 0.0
        %446 = vmatpush1.msra.mxu0 %v431
        %447 = vmatprep.subr.mxu0 0.0
        %448 = vmatpush1.msra.mxu0 %v430
        %449 = vmatprep.subr.mxu0 0.0
        %450 = vmatpush1.msra.mxu0 %v429
        %451 = vmatprep.subr.mxu0 0.0
        %452 = vmatpush1.msra.mxu0 %v428
        %453 = vmatprep.subr.mxu0 0.0
        %454 = vmatpush1.msra.mxu0 %v427
        %455 = vmatprep.subr.mxu0 0.0
        %456 = vmatpush1.msra.mxu0 %v426
        %457 = vmatprep.subr.mxu0 0.0
        %458 = vmatpush1.msra.mxu0 %v425
        %459 = vmatprep.subr.mxu0 0.0
        %460 = vmatpush1.msra.mxu0 %v424
        %461 = vmatprep.subr.mxu0 0.0
        %462 = vmatpush1.msra.mxu0 %v423
        %463 = vmatprep.subr.mxu0 0.0
        %464 = vmatpush1.msra.mxu0 %v422
        %465 = vmatprep.subr.mxu0 0.0
        %466 = vmatpush1.msra.mxu0 %v421
        %467 = vmatprep.subr.mxu0 0.0
        %468 = vmatpush1.msra.mxu0 %v420
        %469 = vmatprep.subr.mxu0 0.0
        %470 = vmatpush1.msra.mxu0 %v419
        %471 = vmatprep.subr.mxu0 0.0
        %472 = vmatpush1.msra.mxu0 %v418
        %473 = vmatprep.subr.mxu0 0.0
        %474 = vmatpush2.msra.mxu0 0.0
        %475 = vmatprep.subr.mxu0 0.0
        %476 = vmatpush2.msra.mxu0 0.0
        %477 = vmatprep.subr.mxu0 0.0
        %478 = vmatpush2.msra.mxu0 0.0
        %479 = vmatprep.subr.mxu0 0.0
        %480 = vmatpush2.msra.mxu0 0.0
        %481 = vmatprep.subr.mxu0 0.0
        %482 = vmatpush2.msra.mxu0 0.0
        %483 = vmatprep.subr.mxu0 0.0
        %484 = vmatpush2.msra.mxu0 0.0
        %485 = vmatprep.subr.mxu0 0.0
        %486 = vmatpush2.msra.mxu0 0.0
        %487 = vmatprep.subr.mxu0 0.0
        %488 = vmatpush2.msra.mxu0 0.0
        %489 = vmatprep.subr.mxu0 0.0
        %490 = vmatpush2.msra.mxu0 0.0
        %491 = vmatprep.subr.mxu0 0.0
        %492 = vmatpush2.msra.mxu0 0.0
        %493 = vmatprep.subr.mxu0 0.0
        %494 = vmatpush2.msra.mxu0 0.0
        %495 = vmatprep.subr.mxu0 0.0
        %496 = vmatpush2.msra.mxu0 0.0
        %497 = vmatprep.subr.mxu0 0.0
        %498 = vmatpush2.msra.mxu0 0.0
        %499 = vmatprep.subr.mxu0 0.0
        %500 = vmatpush2.msra.mxu0 0.0
        %501 = vmatprep.subr.mxu0 0.0
        %502 = vmatpush2.msra.mxu0 0.0
        %503 = vmatprep.subr.mxu0 0.0
        %504 = vmatpush2.msra.mxu0 0.0
        %505 = vmatprep.mubr.f32.mxu0 0.0
        %506 = vmatmul.mubr.f32.gmra.mxu0 %v417
        %v507 = vpop.f32.mrf.mxu0
        %v508 = vadd.f32 %v439, %v507
        %v509 = vpop.f32.mrf.mxu0
        %510 = vdwg.mxu0
        %v511 = vld [vmem:[%s317] sm:$0xff]
        %v512 = vadd.f32 %v318, %v511
        %v513 = vadd.f32 %v508, %v512
        %v514 = vsel %vm330, %v513, 0.0
        %515 = vadd.xlane.f32.xlu0 %v514
        %v516 = vpop.xlane.xlu0 %515
        %v517 = vmul.f32 %v516, 0.03125
        %v518 = vsub.f32 %v513, %v517
        %v519 = vmul.f32 %v518, %v518
        %v520 = vsel %vm330, %v519, 0.0
        %521 = vadd.xlane.f32.xlu0 %v520
        %v522 = vpop.xlane.xlu0 %521
        %v523 = vmul.f32 %v522, 0.03125
        %v524 = vadd.f32 %v523, 1e-05
        %v525 = vrsqrt.pop %v524
        %v526 = vmul.f32 %v518, %v525
        %v527 = vld [vmem:[%s6] sm:$0x1]
        %v529 = vlaneseq
        %v530 = vshrl.u32 %v529, 7
        %v531 = vsub.s32 0, %v530
        %v532 = vrot.slane %v527, %v531
        %v534 = vmul.f32 %v526, %v532
        %v535 = vld [vmem:[%s7] sm:$0x1]
        %v537 = vlaneseq
        %v538 = vshrl.u32 %v537, 7
        %v539 = vsub.s32 0, %v538
        %v540 = vrot.slane %v535, %v539
        %v542 = vadd.f32 %v534, %v540
        %543 = vst.msk [vmem:[%s309] sm:$0xff] %vm330, %v542
        %s544 = sand.u32 %s208, 1
        %s545 = scalar_lea.sflag [#allocation3], %s544
        %s546 = sand.u32 %s208, 1
        %s547 = smul.addr %s546, 8
        %s548 = scalar_lea.vmem [#allocation2], %s547
        // Predicated region
        $region53: #{tpu_custom_call.1} parent=51 // pred_check
          %p549 = pneg %p218
        $region54: #{tpu_custom_call.1} parent=51 // pred_check_branch
          %551 = sbr.rel (%p549) target = $region56
        $region55: #{tpu_custom_call.1} parent=51 // pred_region
          %s553 = ssub.s32 128, 128
          %554 = vsyncadd %s545, %s553
          %s555 = smul.addr %s22, 128
          %s556 = scalar_lea.hbm %s8, %s555
          %s558 = sshll.u32 %s548, 4
          %s559 = int_to_ptr.vmem [resolvable:$true] %s558
          %561 = dma.vmem_to_hbm [thread:$0]  %s559, 128, %s556, %s545
        $region56: #{tpu_custom_call.1} parent=51 // pred_fallthru
          _
      $region52: #{tpu_custom_call.1} parent=5 // pred_fallthru
        _
      %p562 = scmp.le.s32.totalorder 2, %s17
      // Predicated region
      $region57: #{tpu_custom_call.1} parent=5 // pred_check
        %p563 = pneg %p562
      $region58: #{tpu_custom_call.1} parent=5 // pred_check_branch
        %565 = sbr.rel (%p563) target = $region60
      $region59: #{tpu_custom_call.1} parent=5 // pred_region
        %s566 = ssub.s32 %s17, 2
        // Predicated region
        $region61: #{tpu_custom_call.1} parent=59 // pred_check
          %p567 = pneg %p224
        $region62: #{tpu_custom_call.1} parent=59 // pred_check_branch
          %569 = sbr.rel (%p567) target = $region64
        $region63: #{tpu_custom_call.1} parent=59 // pred_region
          %s570 = sand.u32 %s209, 1
          %s571 = scalar_lea.sflag [#allocation3], %s570
          %s572 = sand.u32 %s209, 1
          %s573 = smul.addr %s572, 8
          %s574 = scalar_lea.vmem [#allocation2], %s573
          %575 = dma.done %s571, 128
        $region64: #{tpu_custom_call.1} parent=59 // pred_fallthru
          _
      $region60: #{tpu_custom_call.1} parent=5 // pred_fallthru
        _
    $region6: #{tpu_custom_call.1} parent=1 // loop_footer
      %s21 = sadd.s32 1, %s17
    $region7: #{tpu_custom_call.1} parent=1 // loop_footer_branch
      %16 = sbr.rel target = $region3
    $region8: #{tpu_custom_call.1} parent=1 // loop_exit
      _
    %576 = vsyncpa [#allocation3], 1
    %s577 = scalar_lea.sflag [#allocation3], 1
    %578 = vsyncpa %s577, 1

</llo_original>
